<compile_context>
chip_gen: v7x
topology: tpu7x:2x2x1
jax: 0.10.0
libtpu: 0.0.40
codegen_flags: <defaults>
</compile_context>

<pallas_src>
import functools
import math

import jax
import jax.numpy as jnp
from jax.experimental import pallas as pl
from jax.experimental.pallas import tpu as pltpu

_LANES = 128
_F32_MAX = float(jnp.finfo(jnp.float32).max)


def _mape_sums_kernel(pred_ref, target_ref, num_ref, cnt_ref, *,
                      eps, preprocessing, rows, block_rows, tiles_per_core,
                      needs_row_mask):
    i = pl.program_id(1)

    # Per-core resident accumulators: init on the first inner step.
    @pl.when(i == 0)
    def _init():
        num_ref[...] = jnp.zeros_like(num_ref)
        cnt_ref[...] = jnp.zeros_like(cnt_ref)

    p = pred_ref[...].astype(jnp.float32)
    t = target_ref[...].astype(jnp.float32)

    # Static (trace-time) preprocessing selection.
    if preprocessing == "sqrt":
        p = p * p
        t = t * t
    elif preprocessing == "log":
        # expm1 semantics (exp is guaranteed to lower; difference is ~1 ulp away from 0).
        p = jnp.exp(p) - jnp.float32(1.0)
        t = jnp.exp(t) - jnp.float32(1.0)

    bm = p.shape[0]
    valid_target = t > jnp.float32(0.0)
    if needs_row_mask:
        # Kills (a) OOB-garbage rows of a partial last block and (b) the clamped
        # duplicate block when the 2-core split overhangs an odd tile count.
        g = pl.program_id(0) * tiles_per_core + i
        row_ids = g * block_rows + jax.lax.broadcasted_iota(jnp.int32, (bm, _LANES), 0)
        sel = jnp.logical_and(valid_target, row_ids < rows)
    else:
        sel = valid_target

    pe = jnp.abs((p - t) / (t + jnp.float32(eps)))
    # torch.nan_to_num(pe, nan=0.0): NaN -> 0, +inf -> f32 max (pe >= 0, no -inf).
    pe = jnp.where(jnp.isnan(pe), jnp.float32(0.0),
                   jnp.minimum(pe, jnp.float32(_F32_MAX)))
    pe = jnp.where(sel, pe, jnp.float32(0.0))
    ct = jnp.where(sel, jnp.float32(1.0), jnp.float32(0.0))

    if bm % 8 == 0:
        # Vreg-granular reduction (pure VALU adds); cross-lane reduce deferred to wrapper.
        num_ref[0] += pe.reshape(bm // 8, 8, _LANES).sum(axis=0)
        cnt_ref[0] += ct.reshape(bm // 8, 8, _LANES).sum(axis=0)
    else:
        # Tiny input (< 8 rows): accumulate into sublane 0 only.
        num_ref[0, 0:1, :] += pe.sum(axis=0, keepdims=True)
        cnt_ref[0, 0:1, :] += ct.sum(axis=0, keepdims=True)


def mape(pred, target, eps=1e-8, reduction="mean", preprocessing=None,
         block_rows=4096):
    """Pallas equivalent of MAPE.forward for reduction in {'mean', 'sum'}."""
    if reduction not in ("mean", "sum"):
        # TODO(synk): reduction=None (elementwise percentage-error output) not
        # implemented as a Pallas kernel.
        raise NotImplementedError("Pallas MAPE supports reduction='mean' or 'sum'.")
    assert pred.shape == target.shape, (pred.shape, target.shape)

    n = int(math.prod(pred.shape))
    p = jnp.ravel(pred)
    t = jnp.ravel(target)

    if n % _LANES != 0:
        # TODO(synk): zero-copy tail masking for n % 128 != 0; this fallback pads
        # (one copy). Padded targets are 0 -> masked out of both sums.
        pad = (-n) % _LANES
        p = jnp.pad(p, (0, pad))
        t = jnp.pad(t, (0, pad))

    rows = p.shape[0] // _LANES
    p2 = p.reshape(rows, _LANES)        # zero-copy lane-dense view
    t2 = t.reshape(rows, _LANES)

    # Block rows: multiple of 8 (or the full dim for tiny inputs), ~2 MiB f32/input.
    if rows < 8:
        bm = rows
    else:
        bm = min(int(block_rows), (rows // 8) * 8)
    num_tiles = -(-rows // bm)
    ncores = 2 if num_tiles >= 2 else 1          # leading "parallel" axis (v7x: 2 TCs)
    tiles_per_core = -(-num_tiles // ncores)
    last_tile = num_tiles - 1
    needs_row_mask = (rows % bm != 0) or (ncores * tiles_per_core != num_tiles)

    def in_map(c, i):
        # Clamp so the overhanging (c, i) of an odd split never DMAs out of bounds;
        # the in-kernel row mask zeroes its contribution.
        return (jnp.minimum(c * tiles_per_core + i, last_tile), 0)

    kernel = functools.partial(
        _mape_sums_kernel, eps=float(eps), preprocessing=preprocessing,
        rows=rows, block_rows=bm, tiles_per_core=tiles_per_core,
        needs_row_mask=needs_row_mask)

    num, cnt = pl.pallas_call(
        kernel,
        out_shape=(
            jax.ShapeDtypeStruct((ncores, 8, _LANES), jnp.float32),
            jax.ShapeDtypeStruct((ncores, 8, _LANES), jnp.float32),
        ),
        grid=(ncores, tiles_per_core),
        in_specs=[
            pl.BlockSpec((bm, _LANES), in_map),
            pl.BlockSpec((bm, _LANES), in_map),
        ],
        out_specs=(
            pl.BlockSpec((1, 8, _LANES), lambda c, i: (c, 0, 0)),
            pl.BlockSpec((1, 8, _LANES), lambda c, i: (c, 0, 0)),
        ),
        compiler_params=pltpu.CompilerParams(
            dimension_semantics=("parallel", "arbitrary")),
    )(p2, t2)

    total = jnp.sum(num)
    if reduction == "sum":
        return total
    count = jnp.sum(cnt)
    return total / (count + jnp.float32(eps))


def mape_ref(pred, target, eps=1e-8, reduction="mean", preprocessing=None):
    """Pure-JAX reference matching the PyTorch MAPE.forward exactly."""
    pred = pred.astype(jnp.float32)
    target = target.astype(jnp.float32)
    if preprocessing == "sqrt":
        pred = pred ** 2
        target = target ** 2
    elif preprocessing == "log":
        pred = jnp.expm1(pred)
        target = jnp.expm1(target)
    mask = target > 0
    pe = jnp.abs((pred - target) / (target + eps))
    pe = jnp.nan_to_num(pe, nan=0.0) * mask
    if reduction == "mean":
        return pe.sum() / (mask.sum() + eps)
    if reduction == "sum":
        return pe.sum()
    return pe


if __name__ == "__main__":
    def make_inputs(shape, kp, kt):
        # Mixed-sign, well-conditioned targets (|t| in [0.5, 1.5]) so MAPE values
        # stay O(1) and the f32 comparison against the reference is meaningful.
        u = jax.random.uniform(kt, shape, minval=-1.0, maxval=1.0)
        target = jnp.where(u >= 0, u + 0.5, u - 0.5)
        pred = target + 0.3 * jax.random.normal(kp, shape)
        return pred, target

    k1, k2 = jax.random.split(jax.random.PRNGKey(0))

    # (batch, channels, H, W) = (2, 4, 16, 16)
    shape = (2, 4, 16, 16)
    pred, target = make_inputs(shape, k1, k2)

    for kw in (dict(), dict(reduction="sum"),
               dict(preprocessing="sqrt"), dict(preprocessing="log")):
        out = jax.block_until_ready(mape(pred, target, **kw))
        ref = mape_ref(pred, target, **kw)
        assert jnp.allclose(out, ref, rtol=1e-4, atol=1e-6), (kw, out, ref)

    # Exercise: odd tile count (2-core overhang + clamp), partial last block,
    # tiny (<8 rows) path, and the n % 128 != 0 pad fallback.
    extra = [
        ((2, 92, 128), dict(block_rows=8)),     # rows=184, 23 tiles -> overhang
        ((1, 20, 128), dict(block_rows=16)),    # rows=20, partial last block
        ((3, 128), dict()),                     # rows=3 (<8), tiny path
        ((2, 3, 5, 7), dict()),                 # n=210, pad fallback
    ]
    for idx, (shp, kw) in enumerate(extra):
        kp, kt = jax.random.split(jax.random.PRNGKey(idx + 1))
        p, t = make_inputs(shp, kp, kt)
        out = jax.block_until_ready(mape(p, t, **kw))
        ref = mape_ref(p, t)
        assert jnp.allclose(out, ref, rtol=1e-4, atol=1e-6), (shp, out, ref)

    print("KERNEL_OK")
</pallas_src>

<mosaic_0001>
module attributes {stable_mosaic.version = 11 : i64} {
  func.func @_mape_sums_kernel(%arg0: i32, %arg1: i32, %arg2: memref<16x128xf32, #tpu.memory_space<vmem>>, %arg3: memref<16x128xf32, #tpu.memory_space<vmem>>, %arg4: memref<1x8x128xf32, #tpu.memory_space<vmem>>, %arg5: memref<1x8x128xf32, #tpu.memory_space<vmem>>) attributes {dimension_semantics = [#tpu.dimension_semantics<parallel>, #tpu.dimension_semantics<arbitrary>], iteration_bounds = array<i64: 1, 1>, scalar_prefetch = 0 : i64, scratch_operands = 0 : i64, tpu.core_type = #tpu.core_type<tc>, window_params = [{transform_indices = @transform_0, window_bounds = array<i64: 16, 128>}, {transform_indices = @transform_1, window_bounds = array<i64: 16, 128>}, {transform_indices = @transform_2, window_bounds = array<i64: 1, 8, 128>}, {transform_indices = @transform_3, window_bounds = array<i64: 1, 8, 128>}]} {
    %c0_i32 = arith.constant 0 : i32
    %0 = arith.cmpi eq, %arg1, %c0_i32 : i32
    %1 = arith.extui %0 : i1 to i32
    %c0_i32_0 = arith.constant 0 : i32
    %2 = arith.cmpi ne, %1, %c0_i32_0 : i32
    scf.if %2 {
      %cst_24 = arith.constant 0.000000e+00 : f32
      %38 = vector.broadcast %cst_24 : f32 to vector<1x8x128xf32>
      %c0_25 = arith.constant 0 : index
      %c0_26 = arith.constant 0 : index
      %c0_27 = arith.constant 0 : index
      %39 = vector.load %arg4[%c0_25, %c0_26, %c0_27] : memref<1x8x128xf32, #tpu.memory_space<vmem>>, vector<1x8x128xf32>
      tpu.vector_store %arg4[%c0_25, %c0_26, %c0_27], %38 {strides = array<i32>} : memref<1x8x128xf32, #tpu.memory_space<vmem>>, vector<1x8x128xf32>,
      %cst_28 = arith.constant 0.000000e+00 : f32
      %40 = vector.broadcast %cst_28 : f32 to vector<1x8x128xf32>
      %c0_29 = arith.constant 0 : index
      %c0_30 = arith.constant 0 : index
      %c0_31 = arith.constant 0 : index
      %41 = vector.load %arg5[%c0_29, %c0_30, %c0_31] : memref<1x8x128xf32, #tpu.memory_space<vmem>>, vector<1x8x128xf32>
      tpu.vector_store %arg5[%c0_29, %c0_30, %c0_31], %40 {strides = array<i32>} : memref<1x8x128xf32, #tpu.memory_space<vmem>>, vector<1x8x128xf32>,
    } else {
    }
    %c0 = arith.constant 0 : index
    %c0_1 = arith.constant 0 : index
    %3 = vector.load %arg2[%c0, %c0_1] : memref<16x128xf32, #tpu.memory_space<vmem>>, vector<16x128xf32>
    %c0_2 = arith.constant 0 : index
    %c0_3 = arith.constant 0 : index
    %4 = vector.load %arg3[%c0_2, %c0_3] : memref<16x128xf32, #tpu.memory_space<vmem>>, vector<16x128xf32>
    %cst = arith.constant 0.000000e+00 : f32
    %5 = vector.broadcast %cst : f32 to vector<16x128xf32>
    %6 = arith.cmpf ogt, %4, %5 : vector<16x128xf32>
    %7 = arith.subf %3, %4 : vector<16x128xf32>
    %cst_4 = arith.constant 9.99999993E-9 : f32
    %8 = vector.broadcast %cst_4 : f32 to vector<16x128xf32>
    %9 = arith.addf %4, %8 : vector<16x128xf32>
    %10 = arith.divf %7, %9 : vector<16x128xf32>
    %11 = math.absf %10 : vector<16x128xf32>
    %12 = arith.cmpf one, %11, %11 : vector<16x128xf32>
    %cst_5 = arith.constant 3.40282347E+38 : f32
    %13 = vector.broadcast %cst_5 : f32 to vector<16x128xf32>
    %14 = arith.minimumf %11, %13 : vector<16x128xf32>
    %cst_6 = arith.constant 0.000000e+00 : f32
    %15 = vector.broadcast %cst_6 : f32 to vector<16x128xf32>
    %16 = arith.select %12, %15, %14 : vector<16x128xi1>, vector<16x128xf32>
    %cst_7 = arith.constant 0.000000e+00 : f32
    %17 = vector.broadcast %cst_7 : f32 to vector<16x128xf32>
    %18 = arith.select %6, %16, %17 : vector<16x128xi1>, vector<16x128xf32>
    %cst_8 = arith.constant 1.000000e+00 : f32
    %cst_9 = arith.constant 0.000000e+00 : f32
    %19 = vector.broadcast %cst_8 : f32 to vector<16x128xf32>
    %20 = vector.broadcast %cst_9 : f32 to vector<16x128xf32>
    %21 = arith.select %6, %19, %20 : vector<16x128xi1>, vector<16x128xf32>
    %c0_10 = arith.constant 0 : index
    %c0_11 = arith.constant 0 : index
    %c0_12 = arith.constant 0 : index
    %22 = vector.load %arg4[%c0_10, %c0_11, %c0_12] : memref<1x8x128xf32, #tpu.memory_space<vmem>>, vector<1x8x128xf32>
    %23 = vector.shape_cast %22 : vector<1x8x128xf32> to vector<8x128xf32>
    %24 = vector.shape_cast %18 : vector<16x128xf32> to vector<2x8x128xf32>
    %cst_13 = arith.constant dense<0.000000e+00> : vector<8x128xf32>
    %25 = vector.multi_reduction <add>, %24, %cst_13 [0] : vector<2x8x128xf32> to vector<8x128xf32>
    %26 = arith.addf %23, %25 : vector<8x128xf32>
    %c0_14 = arith.constant 0 : index
    %c0_15 = arith.constant 0 : index
    %c0_16 = arith.constant 0 : index
    %27 = vector.load %arg4[%c0_14, %c0_15, %c0_16] : memref<1x8x128xf32, #tpu.memory_space<vmem>>, vector<1x8x128xf32>
    %28 = vector.shape_cast %27 : vector<1x8x128xf32> to vector<8x128xf32>
    %29 = vector.shape_cast %26 : vector<8x128xf32> to vector<1x8x128xf32>
    tpu.vector_store %arg4[%c0_14, %c0_15, %c0_16], %29 {strides = array<i32>} : memref<1x8x128xf32, #tpu.memory_space<vmem>>, vector<1x8x128xf32>,
    %c0_17 = arith.constant 0 : index
    %c0_18 = arith.constant 0 : index
    %c0_19 = arith.constant 0 : index
    %30 = vector.load %arg5[%c0_17, %c0_18, %c0_19] : memref<1x8x128xf32, #tpu.memory_space<vmem>>, vector<1x8x128xf32>
    %31 = vector.shape_cast %30 : vector<1x8x128xf32> to vector<8x128xf32>
    %32 = vector.shape_cast %21 : vector<16x128xf32> to vector<2x8x128xf32>
    %cst_20 = arith.constant dense<0.000000e+00> : vector<8x128xf32>
    %33 = vector.multi_reduction <add>, %32, %cst_20 [0] : vector<2x8x128xf32> to vector<8x128xf32>
    %34 = arith.addf %31, %33 : vector<8x128xf32>
    %c0_21 = arith.constant 0 : index
    %c0_22 = arith.constant 0 : index
    %c0_23 = arith.constant 0 : index
    %35 = vector.load %arg5[%c0_21, %c0_22, %c0_23] : memref<1x8x128xf32, #tpu.memory_space<vmem>>, vector<1x8x128xf32>
    %36 = vector.shape_cast %35 : vector<1x8x128xf32> to vector<8x128xf32>
    %37 = vector.shape_cast %34 : vector<8x128xf32> to vector<1x8x128xf32>
    tpu.vector_store %arg5[%c0_21, %c0_22, %c0_23], %37 {strides = array<i32>} : memref<1x8x128xf32, #tpu.memory_space<vmem>>, vector<1x8x128xf32>,
    return
  }
  func.func @transform_0(%arg0: i32, %arg1: i32) -> (i32, i32) {
    %c1_i32 = arith.constant 1 : i32
    %0 = arith.muli %arg0, %c1_i32 : i32
    %1 = arith.addi %0, %arg1 : i32
    %c0_i32 = arith.constant 0 : i32
    %2 = arith.minsi %1, %c0_i32 : i32
    %c0_i32_0 = arith.constant 0 : i32
    %c0_i32_1 = arith.constant 0 : i32
    return %2, %c0_i32_0 : i32, i32
  }
  func.func @transform_1(%arg0: i32, %arg1: i32) -> (i32, i32) {
    %c1_i32 = arith.constant 1 : i32
    %0 = arith.muli %arg0, %c1_i32 : i32
    %1 = arith.addi %0, %arg1 : i32
    %c0_i32 = arith.constant 0 : i32
    %2 = arith.minsi %1, %c0_i32 : i32
    %c0_i32_0 = arith.constant 0 : i32
    %c0_i32_1 = arith.constant 0 : i32
    return %2, %c0_i32_0 : i32, i32
  }
  func.func @transform_2(%arg0: i32, %arg1: i32) -> (i32, i32, i32) {
    %c0_i32 = arith.constant 0 : i32
    %c0_i32_0 = arith.constant 0 : i32
    %c0_i32_1 = arith.constant 0 : i32
    return %arg0, %c0_i32, %c0_i32_0 : i32, i32, i32
  }
  func.func @transform_3(%arg0: i32, %arg1: i32) -> (i32, i32, i32) {
    %c0_i32 = arith.constant 0 : i32
    %c0_i32_0 = arith.constant 0 : i32
    %c0_i32_1 = arith.constant 0 : i32
    return %arg0, %c0_i32, %c0_i32_0 : i32, i32, i32
  }
}

</mosaic_0001>

<llo_original>
// kernel: tpu_custom_call.1
$region0: #{tpu_custom_call.1}
  #allocation0 [shape = 'u32[]', space=smem, size = 0x4, offset = 0x4, fixed_abs, tag = 'smem constant byte address 0x4 - core index']
  #allocation1 [shape = 'u32[144,128]{1,0:T(1,128)}', space=vmem, size = 0x12000, scoped, tag = 'internal scratch']
  %s0 = inlined_call_operand.hbm [shape: f32[16,128], index: 0, kind: input, shape index: {}]
  %s1 = inlined_call_operand.hbm [shape: f32[16,128], index: 1, kind: input, shape index: {}]
  %s2 = inlined_call_operand.hbm [shape: f32[1,8,128], index: 2, kind: output, shape index: {0}]
  %s3 = inlined_call_operand.hbm [shape: f32[1,8,128], index: 3, kind: output, shape index: {1}]
  %4 = xla_tuple %s2, %s3
  %s5 = sld [smem:[#allocation0]]
  $region38: #{tpu_custom_call.1} parent=0
    _
  %s7 = ssub.s32 1, %s5
  %s8 = scalar_select 0, %s7, %s5
  $region1: #{tpu_custom_call.1} parent=0
    #allocation2 [shape = 'u8[8192]{0}', space=vmem, size = 0x2000, scoped, tag = 'input window, operand 0, single buffered']
    #allocation3 [shape = 's32[1]{0}', space=sflag, size = 0x4, scoped, tag = 'scoped memory for tpu_custom_call.1']
    #allocation4 [shape = 's32[1]{0}', space=sflag, size = 0x4, scoped, tag = 'scoped memory for tpu_custom_call.1']
    #allocation5 [shape = 'u8[8192]{0}', space=vmem, size = 0x2000, scoped, tag = 'input window, operand 1, single buffered']
    #allocation6 [shape = 's32[1]{0}', space=sflag, size = 0x4, scoped, tag = 'scoped memory for tpu_custom_call.1']
    #allocation7 [shape = 'u8[4096]{0}', space=vmem, size = 0x1000, scoped, tag = 'output window, operand 0, single buffered']
    #allocation8 [shape = 'u8[4096]{0}', space=vmem, size = 0x1000, scoped, tag = 'output window, operand 1, single buffered']
    #allocation9 [shape = 's32[1]{0}', space=sflag, size = 0x4, scoped, tag = 'scoped memory for tpu_custom_call.1']
    %9 = vsyncpa [#allocation3], 0
    %10 = vsyncpa [#allocation6], 0
    %11 = vsyncpa [#allocation4], 0
    %12 = vsyncpa [#allocation9], 0
    // Predicated region
    $region2: #{tpu_custom_call.1} parent=1 // pred_check
      _
    $region3: #{tpu_custom_call.1} parent=1 // pred_check_branch
      %14 = sbr.rel (0) target = $region5
    $region4: #{tpu_custom_call.1} parent=1 // pred_region
      %s15 = sadd.s32 0, 0
      %p16 = scmp.lt.s32.totalorder %s15, 0
      %s17 = scalar_select %p16, %s15, 0
      %s18 = smul.u32 2, %s17
      %s20 = ssub.s32 256, 256
      %21 = vsyncadd [#allocation3], %s20
      %s22 = smul.addr %s18, 128
      %s23 = scalar_lea.hbm %s0, %s22
      %s24 = sshll.u32 [#allocation2], 4
      %s25 = int_to_ptr.vmem [resolvable:$true] %s24
      %30 = dma.hbm_to_vmem [thread:$0]  %s23, 256, %s25, [#allocation3], 128, 128, 8
    $region5: #{tpu_custom_call.1} parent=1 // pred_fallthru
      _
    // Predicated region
    $region6: #{tpu_custom_call.1} parent=1 // pred_check
      _
    $region7: #{tpu_custom_call.1} parent=1 // pred_check_branch
      %32 = sbr.rel (0) target = $region9
    $region8: #{tpu_custom_call.1} parent=1 // pred_region
      %s33 = sadd.s32 0, 0
      %p34 = scmp.lt.s32.totalorder %s33, 0
      %s35 = scalar_select %p34, %s33, 0
      %s36 = smul.u32 2, %s35
      %s38 = ssub.s32 256, 256
      %39 = vsyncadd [#allocation6], %s38
      %s40 = smul.addr %s36, 128
      %s41 = scalar_lea.hbm %s1, %s40
      %s42 = sshll.u32 [#allocation5], 4
      %s43 = int_to_ptr.vmem [resolvable:$true] %s42
      %48 = dma.hbm_to_vmem [thread:$0]  %s41, 256, %s43, [#allocation6], 128, 128, 8
    $region9: #{tpu_custom_call.1} parent=1 // pred_fallthru
      _
    // Predicated region
    $region10: #{tpu_custom_call.1} parent=1 // pred_check
      _
    $region11: #{tpu_custom_call.1} parent=1 // pred_check_branch
      %50 = sbr.rel (0) target = $region13
    $region12: #{tpu_custom_call.1} parent=1 // pred_region
      %51 = dma.done [#allocation3], 256
    $region13: #{tpu_custom_call.1} parent=1 // pred_fallthru
      _
    // Predicated region
    $region14: #{tpu_custom_call.1} parent=1 // pred_check
      _
    $region15: #{tpu_custom_call.1} parent=1 // pred_check_branch
      %53 = sbr.rel (0) target = $region17
    $region16: #{tpu_custom_call.1} parent=1 // pred_region
      %54 = dma.done [#allocation6], 256
    $region17: #{tpu_custom_call.1} parent=1 // pred_fallthru
      _
    %s55 = sadd.s32 0, 0
    %p56 = scmp.lt.s32.totalorder %s55, 0
    %s57 = scalar_select %p56, %s55, 0
    %s58 = smul.u32 2, %s57
    %s59 = sadd.s32 0, 0
    %p60 = scmp.lt.s32.totalorder %s59, 0
    %s61 = scalar_select %p60, %s59, 0
    %s62 = smul.u32 2, %s61
    %p63 = scmp.eq.s32.totalorder 0, 0
    // Predicated region
    $region18: #{tpu_custom_call.1} parent=1 // pred_check
      %p64 = pneg %p63
    $region19: #{tpu_custom_call.1} parent=1 // pred_check_branch
      %66 = sbr.rel (%p64) target = $region21
    $region20: #{tpu_custom_call.1} parent=1 // pred_region
      %67 = vst [vmem:[#allocation7] sm:$0xff] 0.0
      %68 = vst [vmem:[#allocation8] sm:$0xff] 0.0
    $region21: #{tpu_custom_call.1} parent=1 // pred_fallthru
      _
    %v69 = vld [vmem:[#allocation2] sm:$0xff]
    %v70 = vld [vmem:[#allocation2 + $0x8] sm:$0xff]
    %v71 = vld [vmem:[#allocation5] sm:$0xff]
    %v72 = vld [vmem:[#allocation5 + $0x8] sm:$0xff]
    %vm73 = vcmp.gt.f32.partialorder %v71, 0.0
    %vm74 = vcmp.gt.f32.partialorder %v72, 0.0
    %v75 = vsub.f32 %v69, %v71
    %v76 = vsub.f32 %v70, %v72
    %v77 = vadd.f32 %v71, 1e-08
    %v78 = vadd.f32 %v72, 1e-08
    %v79 = vrcp.pop %v77
    %v80 = vmul.f32 %v75, %v79
    %v81 = vrcp.pop %v78
    %v82 = vmul.f32 %v76, %v81
    %v83 = vand.u32 2147483647, %v80
    %v84 = vand.u32 2147483647, %v82
    %vm85 = vcmp.ne.f32.partialorder %v83, %v83
    %vm86 = vcmp.ne.f32.partialorder %v84, %v84
    %v87 = vmin.f32 %v83, 3.4028235e+38
    %v88 = vmin.f32 %v84, 3.4028235e+38
    %v89 = vsel %vm85, 0.0, %v87
    %v90 = vsel %vm86, 0.0, %v88
    %v91 = vsel %vm73, %v89, 0.0
    %v92 = vsel %vm74, %v90, 0.0
    %v93 = vsel %vm73, 1.0, 0.0
    %v94 = vsel %vm74, 1.0, 0.0
    %v95 = vld [vmem:[#allocation7] sm:$0xff]
    %v96 = vadd.f32 %v91, %v92
    %v97 = vadd.f32 %v95, %v96
    %98 = vst [vmem:[#allocation7] sm:$0xff] %v97
    %v99 = vld [vmem:[#allocation8] sm:$0xff]
    %v100 = vadd.f32 %v93, %v94
    %v101 = vadd.f32 %v99, %v100
    %102 = vst [vmem:[#allocation8] sm:$0xff] %v101
    // Predicated region
    $region22: #{tpu_custom_call.1} parent=1 // pred_check
      _
    $region23: #{tpu_custom_call.1} parent=1 // pred_check_branch
      %104 = sbr.rel (0) target = $region25
    $region24: #{tpu_custom_call.1} parent=1 // pred_region
      %s106 = ssub.s32 128, 128
      %107 = vsyncadd [#allocation4], %s106
      %s109 = sshll.u32 [#allocation7], 4
      %s110 = int_to_ptr.vmem [resolvable:$true] %s109
      %112 = dma.vmem_to_hbm [thread:$0]  %s110, 128, %s2, [#allocation4]
    $region25: #{tpu_custom_call.1} parent=1 // pred_fallthru
      _
    // Predicated region
    $region26: #{tpu_custom_call.1} parent=1 // pred_check
      _
    $region27: #{tpu_custom_call.1} parent=1 // pred_check_branch
      %114 = sbr.rel (0) target = $region29
    $region28: #{tpu_custom_call.1} parent=1 // pred_region
      %s116 = ssub.s32 128, 128
      %117 = vsyncadd [#allocation9], %s116
      %s119 = sshll.u32 [#allocation8], 4
      %s120 = int_to_ptr.vmem [resolvable:$true] %s119
      %122 = dma.vmem_to_hbm [thread:$0]  %s120, 128, %s3, [#allocation9]
    $region29: #{tpu_custom_call.1} parent=1 // pred_fallthru
      _
    // Predicated region
    $region30: #{tpu_custom_call.1} parent=1 // pred_check
      _
    $region31: #{tpu_custom_call.1} parent=1 // pred_check_branch
      %124 = sbr.rel (0) target = $region33
    $region32: #{tpu_custom_call.1} parent=1 // pred_region
      %125 = dma.done [#allocation4], 128
    $region33: #{tpu_custom_call.1} parent=1 // pred_fallthru
      _
    // Predicated region
    $region34: #{tpu_custom_call.1} parent=1 // pred_check
      _
    $region35: #{tpu_custom_call.1} parent=1 // pred_check_branch
      %127 = sbr.rel (0) target = $region37
    $region36: #{tpu_custom_call.1} parent=1 // pred_region
      %128 = dma.done [#allocation9], 128
    $region37: #{tpu_custom_call.1} parent=1 // pred_fallthru
      _
    %129 = vsyncpa [#allocation3], 1
    %130 = vsyncpa [#allocation6], 1
    %131 = vsyncpa [#allocation4], 1
    %132 = vsyncpa [#allocation9], 1

</llo_original>
